<compile_context>
chip_gen: v7x
topology: tpu7x:2x2x1
jax: 0.10.0
libtpu: 0.0.40
codegen_flags: <defaults>
</compile_context>

<pallas_src>
from functools import partial

import numpy as np
import jax
import jax.numpy as jnp
from jax.experimental import pallas as pl
from jax.experimental.pallas import tpu as pltpu


# -----------------------------------------------------------------------------
# Diffusion schedule (identical arithmetic to the PyTorch __init__, in float64)
# -----------------------------------------------------------------------------
def make_schedule(beta_1, beta_T, T, eta, timesteps, skip_type):
    assert 0 < timesteps <= T, "timesteps out of range"
    if skip_type == "uniform":
        skip = T // timesteps
        seq = list(range(0, T, skip))
    elif skip_type == "quad":
        s = np.linspace(0, np.sqrt(T * 0.8), timesteps) ** 2
        seq = [int(v) for v in list(s)]
    else:
        raise ValueError(skip_type)

    betas_full = np.linspace(beta_1, beta_T, T).astype(np.float64)
    alphas = 1.0 - betas_full
    alphas_bar = np.cumprod(alphas, axis=0)[seq]
    alphas_bar_prev = np.concatenate([[1.0], alphas_bar])[:-1]

    betas = 1.0 - alphas_bar / alphas_bar_prev
    c1 = eta * np.sqrt(betas * (1.0 - alphas_bar_prev) / (1.0 - alphas_bar))
    c2 = np.sqrt(1.0 - alphas_bar_prev - c1 ** 2)
    coeff1 = np.sqrt(1.0 / (1.0 - betas))
    coeff2 = coeff1 * np.sqrt(1.0 - alphas_bar) - c2
    posterior_var = c1 ** 2
    return (seq,
            coeff1.astype(np.float32),
            coeff2.astype(np.float32),
            posterior_var.astype(np.float32))


# -----------------------------------------------------------------------------
# Fused Pallas kernel: all reverse-diffusion steps for one tile of pixels
#   grid = (pixel_tiles, num_steps); x resident in VMEM scratch across step axis
# -----------------------------------------------------------------------------
def _fused_sampler_kernel(scal_ref,    # SMEM  [S, 3]        : coeff1, coeff2, sqrt(var)
                          x_ref,       # VMEM  [C, TP]  f32  : x_T tile (read at s == 0)
                          noise_ref,   # VMEM  [1, C, TP] bf16 : per-step noise tile
                          w1t_ref,     # VMEM  [HID, C] f32
                          tb_ref,      # VMEM  [1, HID, 1] f32 : b1 + temb(step)
                          w2t_ref,     # VMEM  [C, HID] f32
                          b2t_ref,     # VMEM  [C, 1]   f32
                          o_ref,       # VMEM  [C, TP]  f32  : written on final step only
                          acc_ref):    # VMEM  [C, TP]  f32  scratch (x resident across steps)
    s = pl.program_id(1)
    n_steps = pl.num_programs(1)

    @pl.when(s == 0)
    def _init():
        acc_ref[...] = x_ref[...]

    x = acc_ref[...]                                                   # [C, TP]

    # eps-model: per-pixel MLP (1x1 conv -> SiLU -> 1x1 conv), pixels on lanes.
    h = jnp.dot(w1t_ref[...], x, preferred_element_type=jnp.float32)   # [HID, TP]
    h = h + tb_ref[0]                                                  # + (b1 + temb)  [HID,1]
    h = h * jax.nn.sigmoid(h)                                          # SiLU
    eps = jnp.dot(w2t_ref[...], h, preferred_element_type=jnp.float32) # [C, TP]
    eps = eps + b2t_ref[...]

    c1 = scal_ref[s, 0]
    c2 = scal_ref[s, 1]
    sv = scal_ref[s, 2]

    acc_ref[...] = c1 * x - c2 * eps                                   # posterior mean

    @pl.when(sv > 0.0)                                                 # skip add when noise==0
    def _add_noise():
        acc_ref[...] = acc_ref[...] + sv * noise_ref[0].astype(jnp.float32)

    @pl.when(s == n_steps - 1)                                         # clip + single HBM store
    def _finalize():
        o_ref[...] = jnp.clip(acc_ref[...], -1.0, 1.0)


def _build_fused_call(S, C, HID, n_rows, tp):
    grid = (n_rows // tp, S)   # pixel tiles outer (parallel), diffusion steps inner (arbitrary)
    return pl.pallas_call(
        _fused_sampler_kernel,
        out_shape=jax.ShapeDtypeStruct((C, n_rows), jnp.float32),
        grid=grid,
        in_specs=[
            pl.BlockSpec(memory_space=pltpu.MemorySpace.SMEM),      # per-step scalar table
            pl.BlockSpec((C, tp), lambda p, s: (0, p)),             # x_T (fetched once / tile)
            pl.BlockSpec((1, C, tp), lambda p, s: (s, 0, p)),       # noise (streamed per step)
            pl.BlockSpec((HID, C), lambda p, s: (0, 0)),            # W1^T (fetched once)
            pl.BlockSpec((1, HID, 1), lambda p, s: (s, 0, 0)),      # b1 + temb table
            pl.BlockSpec((C, HID), lambda p, s: (0, 0)),            # W2^T (fetched once)
            pl.BlockSpec((C, 1), lambda p, s: (0, 0)),              # b2^T (fetched once)
        ],
        out_specs=pl.BlockSpec((C, tp), lambda p, s: (0, p)),       # lane-dense output
        scratch_shapes=[pltpu.VMEM((C, tp), jnp.float32)],          # resident x accumulator
        compiler_params=pltpu.CompilerParams(
            dimension_semantics=("parallel", "arbitrary")),
    )


def _pick_tile(n_rows, max_tp):
    """Largest multiple of 128 that divides n_rows and is <= max_tp."""
    tp = 128
    cand = 128
    while cand <= min(n_rows, max_tp):
        if n_rows % cand == 0:
            tp = cand
        cand += 128
    return tp


# -----------------------------------------------------------------------------
# End-to-end jitted sampler (layout transform + noise gen + fused kernel)
# -----------------------------------------------------------------------------
@partial(jax.jit, static_argnames=("tp",))
def _sample_jit(x_T, noise_key, scal_tab, temb_tab, w1t, w2t, b2t, tp):
    B, C, H, W = x_T.shape
    S = scal_tab.shape[0]
    HID = w1t.shape[0]
    n_rows = B * H * W

    # NCHW -> [C, B*H*W]  (pixels on the 128-lane axis)
    x_cn = jnp.transpose(x_T, (1, 0, 2, 3)).reshape(C, n_rows).astype(jnp.float32)

    # Noise for all reverse steps, generated once; streamed to the kernel in bf16
    # (last step uses zero noise via sv == 0, so its slot is simply unused).
    noise = jax.random.normal(noise_key, (S, C, n_rows), dtype=jnp.bfloat16)

    fused = _build_fused_call(S, C, HID, n_rows, tp)
    x0_cn = fused(scal_tab, x_cn, noise, w1t, temb_tab, w2t, b2t)

    # [C, B*H*W] -> NCHW
    return jnp.transpose(x0_cn.reshape(C, B, H, W), (1, 0, 2, 3))


# -----------------------------------------------------------------------------
# Sampler wrapper
# -----------------------------------------------------------------------------
class PallasDiffusionSampler:
    def __init__(self, beta_1, beta_T, T, eta, timesteps, skip_type,
                 C, hidden, key):
        self.T = T
        self.seq, coeff1, coeff2, post_var = make_schedule(
            beta_1, beta_T, T, eta, timesteps, skip_type)
        self.C = C
        self.hidden = hidden

        # deterministic synthetic eps-model parameters
        k1, k2, k3, k4 = jax.random.split(key, 4)
        s = 0.1
        W1 = (s * jax.random.normal(k1, (C, hidden))).astype(jnp.float32)
        b1 = jnp.zeros((1, hidden), jnp.float32)
        W2 = (s * jax.random.normal(k2, (hidden, C))).astype(jnp.float32)
        b2 = jnp.zeros((1, C), jnp.float32)
        Wt = (s * jax.random.normal(k3, (hidden, hidden))).astype(jnp.float32)
        bt = (s * jax.random.normal(k4, (hidden,))).astype(jnp.float32)

        # transposed weights for the pixels-on-lanes kernel layout
        self.w1t = jnp.transpose(W1)        # [hidden, C]
        self.w2t = jnp.transpose(W2)        # [C, hidden]
        self.b2t = jnp.transpose(b2)        # [C, 1]

        # per-reverse-step tables, already in reverse (sampling) order
        rev = list(reversed(list(enumerate(self.seq))))
        S = len(rev)
        scal = np.zeros((S, 3), np.float32)
        tsteps = np.zeros((S,), np.float32)
        for si, (i, t) in enumerate(rev):
            scal[si, 0] = coeff1[i]
            scal[si, 1] = coeff2[i]
            scal[si, 2] = float(np.sqrt(post_var[i])) if t > 0 else 0.0
            tsteps[si] = float(t)
        self.scal_tab = jnp.asarray(scal)

        # sinusoidal time embedding -> linear, folded with b1:  [S, hidden, 1]
        half = hidden // 2
        freqs = jnp.exp(-jnp.log(10000.0) * jnp.arange(half, dtype=jnp.float32) / half)
        ang = jnp.asarray(tsteps)[:, None] * freqs[None, :]               # [S, half]
        emb = jnp.concatenate([jnp.sin(ang), jnp.cos(ang)], axis=-1)      # [S, hidden]
        temb = emb @ Wt + bt + b1                                         # [S, hidden]
        self.temb_tab = temb.reshape(S, hidden, 1)

    def __call__(self, x_T, noise_key, max_tile_pixels=2048):
        B, C, H, W = x_T.shape
        assert C == self.C
        n_rows = B * H * W
        # TODO(synk): support B*H*W not a multiple of 128 via a masked tail tile.
        assert n_rows % 128 == 0, "B*H*W must be a multiple of 128"
        tp = _pick_tile(n_rows, max_tile_pixels)
        return _sample_jit(x_T, noise_key, self.scal_tab, self.temb_tab,
                           self.w1t, self.w2t, self.b2t, tp=tp)


# -----------------------------------------------------------------------------
if __name__ == "__main__":
    B, C, H, W = 2, 4, 16, 16
    hidden = 32
    T, timesteps = 16, 8

    key = jax.random.PRNGKey(0)
    k_param, k_input, k_noise = jax.random.split(key, 3)

    sampler = PallasDiffusionSampler(
        beta_1=1e-4, beta_T=0.02, T=T, eta=0.5, timesteps=timesteps,
        skip_type="uniform", C=C, hidden=hidden, key=k_param)

    x_T = jax.random.normal(k_input, (B, C, H, W), jnp.float32)

    x_0 = sampler(x_T, noise_key=k_noise)
    x_0 = jax.block_until_ready(x_0)

    assert x_0.shape == (B, C, H, W)
    assert not bool(jnp.isnan(x_0).any()), "nan in tensor."
    assert bool((x_0 <= 1.0).all()) and bool((x_0 >= -1.0).all())
    print("KERNEL_OK")
</pallas_src>

<mosaic_0001>
module attributes {stable_mosaic.version = 11 : i64} {
  func.func @_fused_sampler_kernel(%arg0: i32, %arg1: i32, %arg2: memref<8x3xf32, #tpu.memory_space<smem>>, %arg3: memref<4x512xf32, #tpu.memory_space<vmem>>, %arg4: memref<1x4x512xbf16, #tpu.memory_space<vmem>>, %arg5: memref<32x4xf32, #tpu.memory_space<vmem>>, %arg6: memref<1x32x1xf32, #tpu.memory_space<vmem>>, %arg7: memref<4x32xf32, #tpu.memory_space<vmem>>, %arg8: memref<4x1xf32, #tpu.memory_space<vmem>>, %arg9: memref<4x512xf32, #tpu.memory_space<vmem>>, %arg10: memref<4x512xf32, #tpu.memory_space<vmem>>) attributes {dimension_semantics = [#tpu.dimension_semantics<parallel>, #tpu.dimension_semantics<arbitrary>], iteration_bounds = array<i64: 1, 8>, scalar_prefetch = 0 : i64, scratch_operands = 1 : i64, tpu.core_type = #tpu.core_type<tc>, window_params = [{transform_indices = @transform_0, window_bounds = array<i64: 8, 3>}, {transform_indices = @transform_1, window_bounds = array<i64: 4, 512>}, {transform_indices = @transform_2, window_bounds = array<i64: 1, 4, 512>}, {pipeline_mode = #tpu.pipeline_mode<synchronous>, transform_indices = @transform_3, window_bounds = array<i64: 32, 4>}, {transform_indices = @transform_4, window_bounds = array<i64: 1, 32, 1>}, {pipeline_mode = #tpu.pipeline_mode<synchronous>, transform_indices = @transform_5, window_bounds = array<i64: 4, 32>}, {pipeline_mode = #tpu.pipeline_mode<synchronous>, transform_indices = @transform_6, window_bounds = array<i64: 4, 1>}, {transform_indices = @transform_7, window_bounds = array<i64: 4, 512>}]} {
    %c0_i32 = arith.constant 0 : i32
    %0 = arith.cmpi eq, %arg1, %c0_i32 : i32
    %1 = arith.extui %0 : i1 to i32
    %c0_i32_0 = arith.constant 0 : i32
    %2 = arith.cmpi ne, %1, %c0_i32_0 : i32
    scf.if %2 {
      %c0_19 = arith.constant 0 : index
      %c0_20 = arith.constant 0 : index
      %39 = vector.load %arg3[%c0_19, %c0_20] : memref<4x512xf32, #tpu.memory_space<vmem>>, vector<4x512xf32>
      %c0_21 = arith.constant 0 : index
      %c0_22 = arith.constant 0 : index
      %40 = vector.load %arg10[%c0_21, %c0_22] : memref<4x512xf32, #tpu.memory_space<vmem>>, vector<4x512xf32>
      tpu.vector_store %arg10[%c0_21, %c0_22], %39 {strides = array<i32>} : memref<4x512xf32, #tpu.memory_space<vmem>>, vector<4x512xf32>,
    } else {
    }
    %c0 = arith.constant 0 : index
    %c0_1 = arith.constant 0 : index
    %3 = vector.load %arg10[%c0, %c0_1] : memref<4x512xf32, #tpu.memory_space<vmem>>, vector<4x512xf32>
    %c0_2 = arith.constant 0 : index
    %c0_3 = arith.constant 0 : index
    %4 = vector.load %arg5[%c0_2, %c0_3] : memref<32x4xf32, #tpu.memory_space<vmem>>, vector<32x4xf32>
    %cst = arith.constant dense<0.000000e+00> : vector<32x512xf32>
    %5 = tpu.matmul %4, %3, %cst {dimension_numbers = #tpu.dot_dimension_numbers<[1], [0], [0], [1], [0, 0, 1, 1], [], []>} : vector<32x4xf32>, vector<4x512xf32>, vector<32x512xf32> -> vector<32x512xf32>
    %c0_4 = arith.constant 0 : index
    %c0_5 = arith.constant 0 : index
    %c0_6 = arith.constant 0 : index
    %6 = vector.load %arg6[%c0_4, %c0_5, %c0_6] : memref<1x32x1xf32, #tpu.memory_space<vmem>>, vector<1x32x1xf32>
    %7 = vector.shape_cast %6 : vector<1x32x1xf32> to vector<32x1xf32>
    %8 = vector.broadcast %7 : vector<32x1xf32> to vector<32x512xf32>
    %9 = arith.addf %5, %8 : vector<32x512xf32>
    %10 = arith.negf %9 : vector<32x512xf32>
    %11 = math.exp %10 : vector<32x512xf32>
    %cst_7 = arith.constant 1.000000e+00 : f32
    %12 = vector.broadcast %cst_7 : f32 to vector<32x512xf32>
    %13 = arith.addf %12, %11 : vector<32x512xf32>
    %14 = arith.divf %12, %13 : vector<32x512xf32>
    %15 = arith.mulf %9, %14 : vector<32x512xf32>
    %c0_8 = arith.constant 0 : index
    %c0_9 = arith.constant 0 : index
    %16 = vector.load %arg7[%c0_8, %c0_9] : memref<4x32xf32, #tpu.memory_space<vmem>>, vector<4x32xf32>
    %cst_10 = arith.constant dense<0.000000e+00> : vector<4x512xf32>
    %17 = tpu.matmul %16, %15, %cst_10 {dimension_numbers = #tpu.dot_dimension_numbers<[1], [0], [0], [1], [0, 0, 1, 1], [], []>} : vector<4x32xf32>, vector<32x512xf32>, vector<4x512xf32> -> vector<4x512xf32>
    %c0_11 = arith.constant 0 : index
    %c0_12 = arith.constant 0 : index
    %18 = vector.load %arg8[%c0_11, %c0_12] : memref<4x1xf32, #tpu.memory_space<vmem>>, vector<4x1xf32>
    %19 = vector.broadcast %18 : vector<4x1xf32> to vector<4x512xf32>
    %20 = arith.addf %17, %19 : vector<4x512xf32>
    %21 = arith.index_cast %arg1 : i32 to index
    %c0_13 = arith.constant 0 : index
    %22 = memref.load %arg2[%21, %c0_13] : memref<8x3xf32, #tpu.memory_space<smem>>
    %23 = arith.index_cast %arg1 : i32 to index
    %c1 = arith.constant 1 : index
    %24 = memref.load %arg2[%23, %c1] : memref<8x3xf32, #tpu.memory_space<smem>>
    %25 = arith.index_cast %arg1 : i32 to index
    %c2 = arith.constant 2 : index
    %26 = memref.load %arg2[%25, %c2] : memref<8x3xf32, #tpu.memory_space<smem>>
    %27 = vector.broadcast %22 : f32 to vector<4x512xf32>
    %28 = arith.mulf %27, %3 : vector<4x512xf32>
    %29 = vector.broadcast %24 : f32 to vector<4x512xf32>
    %30 = arith.mulf %29, %20 : vector<4x512xf32>
    %31 = arith.subf %28, %30 : vector<4x512xf32>
    %c0_14 = arith.constant 0 : index
    %c0_15 = arith.constant 0 : index
    %32 = vector.load %arg10[%c0_14, %c0_15] : memref<4x512xf32, #tpu.memory_space<vmem>>, vector<4x512xf32>
    tpu.vector_store %arg10[%c0_14, %c0_15], %31 {strides = array<i32>} : memref<4x512xf32, #tpu.memory_space<vmem>>, vector<4x512xf32>,
    %cst_16 = arith.constant 0.000000e+00 : f32
    %33 = arith.cmpf ogt, %26, %cst_16 : f32
    %34 = arith.extui %33 : i1 to i32
    %c0_i32_17 = arith.constant 0 : i32
    %35 = arith.cmpi ne, %34, %c0_i32_17 : i32
    scf.if %35 {
      %c0_19 = arith.constant 0 : index
      %c0_20 = arith.constant 0 : index
      %39 = vector.load %arg10[%c0_19, %c0_20] : memref<4x512xf32, #tpu.memory_space<vmem>>, vector<4x512xf32>
      %c0_21 = arith.constant 0 : index
      %c0_22 = arith.constant 0 : index
      %c0_23 = arith.constant 0 : index
      %40 = vector.load %arg4[%c0_21, %c0_22, %c0_23] : memref<1x4x512xbf16, #tpu.memory_space<vmem>>, vector<1x4x512xbf16>
      %41 = vector.shape_cast %40 : vector<1x4x512xbf16> to vector<4x512xbf16>
      %42 = arith.extf %41 : vector<4x512xbf16> to vector<4x512xf32>
      %43 = vector.broadcast %26 : f32 to vector<4x512xf32>
      %44 = arith.mulf %43, %42 : vector<4x512xf32>
      %45 = arith.addf %39, %44 : vector<4x512xf32>
      %c0_24 = arith.constant 0 : index
      %c0_25 = arith.constant 0 : index
      %46 = vector.load %arg10[%c0_24, %c0_25] : memref<4x512xf32, #tpu.memory_space<vmem>>, vector<4x512xf32>
      tpu.vector_store %arg10[%c0_24, %c0_25], %45 {strides = array<i32>} : memref<4x512xf32, #tpu.memory_space<vmem>>, vector<4x512xf32>,
    } else {
    }
    %c7_i32 = arith.constant 7 : i32
    %36 = arith.cmpi eq, %arg1, %c7_i32 : i32
    %37 = arith.extui %36 : i1 to i32
    %c0_i32_18 = arith.constant 0 : i32
    %38 = arith.cmpi ne, %37, %c0_i32_18 : i32
    scf.if %38 {
      %c0_19 = arith.constant 0 : index
      %c0_20 = arith.constant 0 : index
      %39 = vector.load %arg10[%c0_19, %c0_20] : memref<4x512xf32, #tpu.memory_space<vmem>>, vector<4x512xf32>
      %cst_21 = arith.constant -1.000000e+00 : f32
      %cst_22 = arith.constant 1.000000e+00 : f32
      %40 = vector.broadcast %cst_21 : f32 to vector<4x512xf32>
      %41 = arith.maximumf %40, %39 : vector<4x512xf32>
      %42 = vector.broadcast %cst_22 : f32 to vector<4x512xf32>
      %43 = arith.minimumf %42, %41 : vector<4x512xf32>
      %c0_23 = arith.constant 0 : index
      %c0_24 = arith.constant 0 : index
      %44 = vector.load %arg9[%c0_23, %c0_24] : memref<4x512xf32, #tpu.memory_space<vmem>>, vector<4x512xf32>
      tpu.vector_store %arg9[%c0_23, %c0_24], %43 {strides = array<i32>} : memref<4x512xf32, #tpu.memory_space<vmem>>, vector<4x512xf32>,
    } else {
    }
    return
  }
  func.func @transform_0(%arg0: i32, %arg1: i32) -> (i32, i32) {
    %c0_i32 = arith.constant 0 : i32
    %c0_i32_0 = arith.constant 0 : i32
    %c0_i32_1 = arith.constant 0 : i32
    return %c0_i32, %c0_i32_0 : i32, i32
  }
  func.func @transform_1(%arg0: i32, %arg1: i32) -> (i32, i32) {
    %c0_i32 = arith.constant 0 : i32
    %c0_i32_0 = arith.constant 0 : i32
    return %c0_i32, %arg0 : i32, i32
  }
  func.func @transform_2(%arg0: i32, %arg1: i32) -> (i32, i32, i32) {
    %c0_i32 = arith.constant 0 : i32
    %c0_i32_0 = arith.constant 0 : i32
    return %arg1, %c0_i32, %arg0 : i32, i32, i32
  }
  func.func @transform_3(%arg0: i32, %arg1: i32) -> (i32, i32) {
    %c0_i32 = arith.constant 0 : i32
    %c0_i32_0 = arith.constant 0 : i32
    %c0_i32_1 = arith.constant 0 : i32
    return %c0_i32, %c0_i32_0 : i32, i32
  }
  func.func @transform_4(%arg0: i32, %arg1: i32) -> (i32, i32, i32) {
    %c0_i32 = arith.constant 0 : i32
    %c0_i32_0 = arith.constant 0 : i32
    %c0_i32_1 = arith.constant 0 : i32
    return %arg1, %c0_i32, %c0_i32_0 : i32, i32, i32
  }
  func.func @transform_5(%arg0: i32, %arg1: i32) -> (i32, i32) {
    %c0_i32 = arith.constant 0 : i32
    %c0_i32_0 = arith.constant 0 : i32
    %c0_i32_1 = arith.constant 0 : i32
    return %c0_i32, %c0_i32_0 : i32, i32
  }
  func.func @transform_6(%arg0: i32, %arg1: i32) -> (i32, i32) {
    %c0_i32 = arith.constant 0 : i32
    %c0_i32_0 = arith.constant 0 : i32
    %c0_i32_1 = arith.constant 0 : i32
    return %c0_i32, %c0_i32_0 : i32, i32
  }
  func.func @transform_7(%arg0: i32, %arg1: i32) -> (i32, i32) {
    %c0_i32 = arith.constant 0 : i32
    %c0_i32_0 = arith.constant 0 : i32
    return %c0_i32, %arg0 : i32, i32
  }
}

</mosaic_0001>

<llo_original>
// kernel: _sample_jit.1
$region0: #{_sample_jit.1}
  #allocation0 [shape = 'u32[]', space=smem, size = 0x4, offset = 0x4, fixed_abs, tag = 'smem constant byte address 0x4 - core index']
  #allocation1 [shape = 'u32[144,128]{1,0:T(1,128)}', space=vmem, size = 0x12000, scoped, tag = 'internal scratch']
  #allocation2 [shape = 'f32[4,512]{1,0:T(4,128)}', space=vmem, size = 0x2000, scoped, tag = 'scratch operand']
  %s0 = inlined_call_operand.vmem [shape: f32[8,3], index: 0, kind: input, shape index: {}]
  %s1 = inlined_call_operand.vmem [shape: f32[4,512], index: 1, kind: input, shape index: {}]
  %s2 = inlined_call_operand.vmem [shape: bf16[8,4,512], index: 2, kind: input, shape index: {}]
  %s3 = inlined_call_operand.vmem [shape: f32[32,4], index: 3, kind: input, shape index: {}]
  %s4 = inlined_call_operand.vmem [shape: f32[8,32,1], index: 4, kind: input, shape index: {}]
  %s5 = inlined_call_operand.vmem [shape: f32[4,32], index: 5, kind: input, shape index: {}]
  %s6 = inlined_call_operand.vmem [shape: f32[4,1], index: 6, kind: input, shape index: {}]
  %s7 = inlined_call_operand.vmem [shape: f32[4,512], index: 7, kind: output, shape index: {}]
  %s8 = sld [smem:[#allocation0]]
  $region77: #{_sample_jit.1} parent=0
    _
  %s10 = ssub.s32 1, %s8
  %s11 = scalar_select 0, %s10, %s8
  $region1: #{_sample_jit.1} parent=0
    #allocation3 [shape = 'u8[4096]{0}', space=smem, size = 0x1000, scoped, tag = 'input window, operand 0, single buffered']
    #allocation4 [shape = 's32[2]{0}', space=sflag, size = 0x8, scoped, tag = 'scoped memory for _sample_jit.1']
    %12 = vsyncpa [#allocation4], 0
    loop: start=0, step=1, limit=10
    $region2: #{_sample_jit.1} parent=1 // loop_pre_header
      _
    $region3: #{_sample_jit.1} parent=1 // loop_header
      %s14 = sphi 0, %s18
      %p15 = scmp.ge.s32.totalorder %s14, 10
      %s21 = sphi 0, %s33
      %s22 = sphi 0, %s29
      %s23 = sphi 0, %s21
      %s24 = sphi 0, %s22
      %s25 = sphi 0, %s23
      %s26 = sphi 0, %s24
      %s34 = sphi 0, %s34
      %s36 = sphi 0, %s34
      %s37 = sphi 0, %s36
      %s51 = sphi 0, %s37
      %s57 = sphi 0, %s59
      %s60 = sphi 0, %s57
      %s61 = sphi 0, %s60
      %s77 = sphi 0, %s61
      %s85 = sphi 0, %s87
      %s88 = sphi 0, %s85
      %s89 = sphi 0, %s88
      %s105 = sphi 0, %s89
      %s109 = sphi 0, %s109
      %s111 = sphi 0, %s109
      %s112 = sphi 0, %s111
      %s126 = sphi 0, %s112
      %s132 = sphi 0, %s134
      %s135 = sphi 0, %s132
      %s136 = sphi 0, %s135
      %s152 = sphi 0, %s136
      %s156 = sphi 0, %s156
      %s158 = sphi 0, %s156
      %s159 = sphi 0, %s158
      %s173 = sphi 0, %s159
      %s177 = sphi 0, %s177
      %s179 = sphi 0, %s177
      %s180 = sphi 0, %s179
      %s194 = sphi 0, %s180
      %s200 = sphi 0, %s202
      %s203 = sphi 0, %s200
      %s204 = sphi 0, %s203
      %s220 = sphi 0, %s204
    $region4: #{_sample_jit.1} parent=1 // loop_header_branch
      %17 = sbr.rel (%p15) target = $region8
    $region5: #{_sample_jit.1} parent=1 // loop_body
      %s19 = ssub.s32 %s14, 1
      %s20 = ssub.s32 %s14, 2
      %s27 = sadd.s32 1, %s22
      %p28 = scmp.ge.s32.totalorder %s27, 8
      %s29 = scalar_select %p28, 0, %s27
      %s30 = sadd.s32 1, %s21
      %s31 = scalar_select %p28, %s30, %s21
      %p32 = scmp.ge.s32.totalorder %s31, 1
      %s33 = scalar_select %p32, 0, %s31
      %s35 = sadd.s32 %s34, 1
      %p38 = scmp.eq.s32.totalorder %s14, 7
      %p39 = scmp.ne.s32.totalorder %s34, %s36
      %p40 = scmp.eq.s32.totalorder %s14, 0
      %p41 = por %p39, %p40
      %p42 = scmp.ne.s32.totalorder %s34, %s36
      %p43 = scmp.eq.s32.totalorder %s19, 7
      %p44 = por %p42, %p43
      %p45 = scmp.ne.s32.totalorder %s36, %s37
      %p46 = scmp.eq.s32.totalorder %s19, 0
      %p47 = por %p45, %p46
      %p48 = scmp.ne.s32.totalorder %s36, %s37
      %p49 = scmp.eq.s32.totalorder %s20, 7
      %p50 = por %p48, %p49
      %p52 = scmp.ne.s32.totalorder %s37, %s51
      %p53 = scmp.eq.s32.totalorder %s20, 0
      %p54 = por %p52, %p53
      %s55 = ssub.s32 %s21, %s33
      %p56 = scmp.eq.s32.totalorder %s55, 0
      %s58 = sadd.s32 %s57, 1
      %s59 = scalar_select %p56, %s57, %s58
      %p62 = pneg %p56
      %p63 = scmp.eq.s32.totalorder %s14, 7
      %p64 = por %p62, %p63
      %p65 = scmp.ne.s32.totalorder %s57, %s60
      %p66 = scmp.eq.s32.totalorder %s14, 0
      %p67 = por %p65, %p66
      %p68 = scmp.ne.s32.totalorder %s57, %s60
      %p69 = scmp.eq.s32.totalorder %s19, 7
      %p70 = por %p68, %p69
      %p71 = scmp.ne.s32.totalorder %s60, %s61
      %p72 = scmp.eq.s32.totalorder %s19, 0
      %p73 = por %p71, %p72
      %p74 = scmp.ne.s32.totalorder %s60, %s61
      %p75 = scmp.eq.s32.totalorder %s20, 7
      %p76 = por %p74, %p75
      %p78 = scmp.ne.s32.totalorder %s61, %s77
      %p79 = scmp.eq.s32.totalorder %s20, 0
      %p80 = por %p78, %p79
      %s81 = ssub.s32 %s22, %s29
      %s82 = ssub.s32 %s21, %s33
      %s83 = sor.u32 %s81, %s82
      %p84 = scmp.eq.s32.totalorder %s83, 0
      %s86 = sadd.s32 %s85, 1
      %s87 = scalar_select %p84, %s85, %s86
      %p90 = pneg %p84
      %p91 = scmp.eq.s32.totalorder %s14, 7
      %p92 = por %p90, %p91
      %p93 = scmp.ne.s32.totalorder %s85, %s88
      %p94 = scmp.eq.s32.totalorder %s14, 0
      %p95 = por %p93, %p94
      %p96 = scmp.ne.s32.totalorder %s85, %s88
      %p97 = scmp.eq.s32.totalorder %s19, 7
      %p98 = por %p96, %p97
      %p99 = scmp.ne.s32.totalorder %s88, %s89
      %p100 = scmp.eq.s32.totalorder %s19, 0
      %p101 = por %p99, %p100
      %p102 = scmp.ne.s32.totalorder %s88, %s89
      %p103 = scmp.eq.s32.totalorder %s20, 7
      %p104 = por %p102, %p103
      %p106 = scmp.ne.s32.totalorder %s89, %s105
      %p107 = scmp.eq.s32.totalorder %s20, 0
      %p108 = por %p106, %p107
      %s110 = sadd.s32 %s109, 1
      %p113 = scmp.eq.s32.totalorder %s14, 7
      %p114 = scmp.ne.s32.totalorder %s109, %s111
      %p115 = scmp.eq.s32.totalorder %s14, 0
      %p116 = por %p114, %p115
      %p117 = scmp.ne.s32.totalorder %s109, %s111
      %p118 = scmp.eq.s32.totalorder %s19, 7
      %p119 = por %p117, %p118
      %p120 = scmp.ne.s32.totalorder %s111, %s112
      %p121 = scmp.eq.s32.totalorder %s19, 0
      %p122 = por %p120, %p121
      %p123 = scmp.ne.s32.totalorder %s111, %s112
      %p124 = scmp.eq.s32.totalorder %s20, 7
      %p125 = por %p123, %p124
      %p127 = scmp.ne.s32.totalorder %s112, %s126
      %p128 = scmp.eq.s32.totalorder %s20, 0
      %p129 = por %p127, %p128
      %s130 = ssub.s32 %s22, %s29
      %p131 = scmp.eq.s32.totalorder %s130, 0
      %s133 = sadd.s32 %s132, 1
      %s134 = scalar_select %p131, %s132, %s133
      %p137 = pneg %p131
      %p138 = scmp.eq.s32.totalorder %s14, 7
      %p139 = por %p137, %p138
      %p140 = scmp.ne.s32.totalorder %s132, %s135
      %p141 = scmp.eq.s32.totalorder %s14, 0
      %p142 = por %p140, %p141
      %p143 = scmp.ne.s32.totalorder %s132, %s135
      %p144 = scmp.eq.s32.totalorder %s19, 7
      %p145 = por %p143, %p144
      %p146 = scmp.ne.s32.totalorder %s135, %s136
      %p147 = scmp.eq.s32.totalorder %s19, 0
      %p148 = por %p146, %p147
      %p149 = scmp.ne.s32.totalorder %s135, %s136
      %p150 = scmp.eq.s32.totalorder %s20, 7
      %p151 = por %p149, %p150
      %p153 = scmp.ne.s32.totalorder %s136, %s152
      %p154 = scmp.eq.s32.totalorder %s20, 0
      %p155 = por %p153, %p154
      %s157 = sadd.s32 %s156, 1
      %p160 = scmp.eq.s32.totalorder %s14, 7
      %p161 = scmp.ne.s32.totalorder %s156, %s158
      %p162 = scmp.eq.s32.totalorder %s14, 0
      %p163 = por %p161, %p162
      %p164 = scmp.ne.s32.totalorder %s156, %s158
      %p165 = scmp.eq.s32.totalorder %s19, 7
      %p166 = por %p164, %p165
      %p167 = scmp.ne.s32.totalorder %s158, %s159
      %p168 = scmp.eq.s32.totalorder %s19, 0
      %p169 = por %p167, %p168
      %p170 = scmp.ne.s32.totalorder %s158, %s159
      %p171 = scmp.eq.s32.totalorder %s20, 7
      %p172 = por %p170, %p171
      %p174 = scmp.ne.s32.totalorder %s159, %s173
      %p175 = scmp.eq.s32.totalorder %s20, 0
      %p176 = por %p174, %p175
      %s178 = sadd.s32 %s177, 1
      %p181 = scmp.eq.s32.totalorder %s14, 7
      %p182 = scmp.ne.s32.totalorder %s177, %s179
      %p183 = scmp.eq.s32.totalorder %s14, 0
      %p184 = por %p182, %p183
      %p185 = scmp.ne.s32.totalorder %s177, %s179
      %p186 = scmp.eq.s32.totalorder %s19, 7
      %p187 = por %p185, %p186
      %p188 = scmp.ne.s32.totalorder %s179, %s180
      %p189 = scmp.eq.s32.totalorder %s19, 0
      %p190 = por %p188, %p189
      %p191 = scmp.ne.s32.totalorder %s179, %s180
      %p192 = scmp.eq.s32.totalorder %s20, 7
      %p193 = por %p191, %p192
      %p195 = scmp.ne.s32.totalorder %s180, %s194
      %p196 = scmp.eq.s32.totalorder %s20, 0
      %p197 = por %p195, %p196
      %s198 = ssub.s32 %s21, %s33
      %p199 = scmp.eq.s32.totalorder %s198, 0
      %s201 = sadd.s32 %s200, 1
      %s202 = scalar_select %p199, %s200, %s201
      %p205 = pneg %p199
      %p206 = scmp.eq.s32.totalorder %s14, 7
      %p207 = por %p205, %p206
      %p208 = scmp.ne.s32.totalorder %s200, %s203
      %p209 = scmp.eq.s32.totalorder %s14, 0
      %p210 = por %p208, %p209
      %p211 = scmp.ne.s32.totalorder %s200, %s203
      %p212 = scmp.eq.s32.totalorder %s19, 7
      %p213 = por %p211, %p212
      %p214 = scmp.ne.s32.totalorder %s203, %s204
      %p215 = scmp.eq.s32.totalorder %s19, 0
      %p216 = por %p214, %p215
      %p217 = scmp.ne.s32.totalorder %s203, %s204
      %p218 = scmp.eq.s32.totalorder %s20, 7
      %p219 = por %p217, %p218
      %p221 = scmp.ne.s32.totalorder %s204, %s220
      %p222 = scmp.eq.s32.totalorder %s20, 0
      %p223 = por %p221, %p222
      %p224 = scmp.le.s32.totalorder 1, %s14
      %p225 = scmp.lt.s32.totalorder %s14, 9
      %p226 = pnand %p224, %p225
      %p227 = pneg %p226
      // Predicated region
      $region9: #{_sample_jit.1} parent=5 // pred_check
        _
      $region10: #{_sample_jit.1} parent=5 // pred_check_branch
        %229 = sbr.rel (%p226) target = $region12
      $region11: #{_sample_jit.1} parent=5 // pred_region
        %s230 = ssub.s32 %s14, 1
        // Predicated region
        $region13: #{_sample_jit.1} parent=11 // pred_check
          %p231 = pneg %p47
        $region14: #{_sample_jit.1} parent=11 // pred_check_branch
          %233 = sbr.rel (%p231) target = $region16
        $region15: #{_sample_jit.1} parent=11 // pred_region
          %s235 = ssub.s32 128, 128
          %236 = vsyncadd [#allocation4], %s235
          %s238 = sshll.u32 %s0, 4
          %s239 = int_to_ptr.vmem [resolvable:$true] %s238
          %241 = dma.vmem_to_smem %s239, 128, [#allocation3], [#allocation4]
        $region16: #{_sample_jit.1} parent=11 // pred_fallthru
          _
        // Predicated region
        $region17: #{_sample_jit.1} parent=11 // pred_check
          %p242 = pneg %p73
        $region18: #{_sample_jit.1} parent=11 // pred_check_branch
          %244 = sbr.rel (%p242) target = $region20
        $region19: #{_sample_jit.1} parent=11 // pred_region
          %s245 = smul.u32 4, %s23
          %p246 = scmp.lt.s32.totalorder %s245, 3
          %s247 = scalar_select %p246, %s245, 3
          %s248 = smul.addr %s247, 4
          %s249 = scalar_lea.vmem %s1, %s248
          %s250 = smul.u32 4, %s23
        $region20: #{_sample_jit.1} parent=11 // pred_fallthru
          _
        // Predicated region
        $region21: #{_sample_jit.1} parent=11 // pred_check
          %p251 = pneg %p122
        $region22: #{_sample_jit.1} parent=11 // pred_check_branch
          %253 = sbr.rel (%p251) target = $region24
        $region23: #{_sample_jit.1} parent=11 // pred_region
          _
        $region24: #{_sample_jit.1} parent=11 // pred_fallthru
          _
        // Predicated region
        $region25: #{_sample_jit.1} parent=11 // pred_check
          %p254 = pneg %p169
        $region26: #{_sample_jit.1} parent=11 // pred_check_branch
          %256 = sbr.rel (%p254) target = $region28
        $region27: #{_sample_jit.1} parent=11 // pred_region
          _
        $region28: #{_sample_jit.1} parent=11 // pred_fallthru
          _
        // Predicated region
        $region29: #{_sample_jit.1} parent=11 // pred_check
          %p257 = pneg %p190
        $region30: #{_sample_jit.1} parent=11 // pred_check_branch
          %259 = sbr.rel (%p257) target = $region32
        $region31: #{_sample_jit.1} parent=11 // pred_region
          _
        $region32: #{_sample_jit.1} parent=11 // pred_fallthru
          _
      $region12: #{_sample_jit.1} parent=5 // pred_fallthru
        _
      %p260 = scmp.lt.s32.totalorder %s14, 8
      // Predicated region
      $region33: #{_sample_jit.1} parent=5 // pred_check
        %p261 = pneg %p260
      $region34: #{_sample_jit.1} parent=5 // pred_check_branch
        %263 = sbr.rel (%p261) target = $region36
      $region35: #{_sample_jit.1} parent=5 // pred_region
        // Predicated region
        $region37: #{_sample_jit.1} parent=35 // pred_check
          %p264 = pneg %p95
        $region38: #{_sample_jit.1} parent=35 // pred_check_branch
          %266 = sbr.rel (%p264) target = $region40
        $region39: #{_sample_jit.1} parent=35 // pred_region
          %s267 = smul.u32 4, %s21
          %p268 = scmp.lt.s32.totalorder %s22, 7
          %s269 = scalar_select %p268, %s22, 7
          %p270 = scmp.lt.s32.totalorder %s267, 3
          %s271 = scalar_select %p270, %s267, 3
          %s272 = smul.addr %s269, 4
          %s273 = sadd.s32 %s271, %s272
          %s274 = smul.addr %s273, 2
          %s275 = scalar_lea.vmem %s2, %s274
          %s276 = smul.u32 4, %s21
        $region40: #{_sample_jit.1} parent=35 // pred_fallthru
          _
        // Predicated region
        $region41: #{_sample_jit.1} parent=35 // pred_check
          %p277 = pneg %p142
        $region42: #{_sample_jit.1} parent=35 // pred_check_branch
          %279 = sbr.rel (%p277) target = $region44
        $region43: #{_sample_jit.1} parent=35 // pred_region
          %p280 = scmp.lt.s32.totalorder %s22, 7
          %s281 = scalar_select %p280, %s22, 7
          %s282 = smul.addr %s281, 4
          %s283 = smul.addr %s282, 8
          %s284 = scalar_lea.vmem %s4, %s283
        $region44: #{_sample_jit.1} parent=35 // pred_fallthru
          _
      $region36: #{_sample_jit.1} parent=5 // pred_fallthru
        _
      %p285 = scmp.le.s32.totalorder 1, %s14
      %p286 = scmp.lt.s32.totalorder %s14, 9
      %p287 = pnand %p285, %p286
      %p288 = pneg %p287
      // Predicated region
      $region45: #{_sample_jit.1} parent=5 // pred_check
        _
      $region46: #{_sample_jit.1} parent=5 // pred_check_branch
        %290 = sbr.rel (%p287) target = $region48
      $region47: #{_sample_jit.1} parent=5 // pred_region
        %s291 = ssub.s32 %s14, 1
        // Predicated region
        $region49: #{_sample_jit.1} parent=47 // pred_check
          %p292 = pneg %p47
        $region50: #{_sample_jit.1} parent=47 // pred_check_branch
          %294 = sbr.rel (%p292) target = $region52
        $region51: #{_sample_jit.1} parent=47 // pred_region
          %295 = dma.done [#allocation4], 128
        $region52: #{_sample_jit.1} parent=47 // pred_fallthru
          _
        %296 = sfence
        %p297 = pneg %p47
        %p298 = pneg %p44
        %s299 = smul.u32 4, %s23
        %p300 = scmp.lt.s32.totalorder %s299, 3
        %s301 = scalar_select %p300, %s299, 3
        %s302 = smul.addr %s301, 4
        %s303 = scalar_lea.vmem %s1, %s302
        %p304 = pneg %p73
        %p305 = pneg %p70
        %s306 = smul.u32 4, %s23
        %p307 = scmp.lt.s32.totalorder %s24, 7
        %s308 = scalar_select %p307, %s24, 7
        %p309 = scmp.lt.s32.totalorder %s306, 3
        %s310 = scalar_select %p309, %s306, 3
        %s311 = smul.addr %s308, 4
        %s312 = sadd.s32 %s310, %s311
        %s313 = smul.addr %s312, 2
        %s314 = scalar_lea.vmem %s2, %s313
        %p315 = pneg %p101
        %p316 = pneg %p98
        %p317 = pneg %p122
        %p318 = pneg %p119
        %p319 = scmp.lt.s32.totalorder %s24, 7
        %s320 = scalar_select %p319, %s24, 7
        %s321 = smul.addr %s320, 4
        %s322 = smul.addr %s321, 8
        %s323 = scalar_lea.vmem %s4, %s322
        %p324 = pneg %p148
        %p325 = pneg %p145
        %p326 = pneg %p169
        %p327 = pneg %p166
        %p328 = pneg %p190
        %p329 = pneg %p187
        %p330 = pneg %p216
        %p331 = pneg %p213
        %s332 = smul.u32 4, %s23
        %p333 = scmp.lt.s32.totalorder %s332, 3
        %s334 = scalar_select %p333, %s332, 3
        %s335 = smul.addr %s334, 4
        %s336 = scalar_lea.vmem %s7, %s335
        %s337 = smul.u32 4, %s23
        %p338 = scmp.lt.s32.totalorder %s337, 3
        %s339 = scalar_select %p338, %s337, 3
        %s340 = smul.addr %s339, 4
        %s341 = scalar_lea.vmem %s1, %s340
        %s342 = smul.u32 4, %s23
        %s343 = smul.u32 4, %s23
        %p344 = scmp.lt.s32.totalorder %s24, 7
        %s345 = scalar_select %p344, %s24, 7
        %p346 = scmp.lt.s32.totalorder %s343, 3
        %s347 = scalar_select %p346, %s343, 3
        %s348 = smul.addr %s345, 4
        %s349 = sadd.s32 %s347, %s348
        %s350 = smul.addr %s349, 2
        %s351 = scalar_lea.vmem %s2, %s350
        %s352 = smul.u32 4, %s23
        %p353 = scmp.lt.s32.totalorder %s24, 7
        %s354 = scalar_select %p353, %s24, 7
        %s355 = smul.addr %s354, 4
        %s356 = smul.addr %s355, 8
        %s357 = scalar_lea.vmem %s4, %s356
        %s358 = smul.u32 4, %s23
        %p359 = scmp.lt.s32.totalorder %s358, 3
        %s360 = scalar_select %p359, %s358, 3
        %s361 = smul.addr %s360, 4
        %s362 = scalar_lea.vmem %s7, %s361
        %s363 = smul.u32 4, %s23
        %p364 = scmp.eq.s32.totalorder %s24, 0
        // Predicated region
        $region53: #{_sample_jit.1} parent=47 // pred_check
          %p365 = pneg %p364
        $region54: #{_sample_jit.1} parent=47 // pred_check_branch
          %367 = sbr.rel (%p365) target = $region56
        $region55: #{_sample_jit.1} parent=47 // pred_region
          %v368 = vld [vmem:[%s341] sm:$0xff]
          %v369 = vld [vmem:[%s341 + $0x8] sm:$0xff]
          %370 = vst [vmem:[#allocation2] sm:$0xff] %v368
          %371 = vst [vmem:[#allocation2 + $0x8] sm:$0xff] %v369
        $region56: #{_sample_jit.1} parent=47 // pred_fallthru
          _
        %v372 = vld [vmem:[#allocation2] sm:$0xff]
        %v373 = vld [vmem:[#allocation2 + $0x8] sm:$0xff]
        %v374 = vld [vmem:[%s3] sm:$0xff]
        %v375 = vld [vmem:[%s3 + $0x8] sm:$0xff]
        %v376 = vld [vmem:[%s3 + $0x10] sm:$0xff]
        %v377 = vld [vmem:[%s3 + $0x18] sm:$0xff]
        %v378 = vld [vmem:[%s357] sm:$0xff]
        %v379 = vld [vmem:[%s357 + $0x8] sm:$0xff]
        %v380 = vld [vmem:[%s357 + $0x10] sm:$0xff]
        %v381 = vld [vmem:[%s357 + $0x18] sm:$0xff]
        %383 = vset.pattern.permute.xlu0 0
        %384 = vperm.xlu0 %383, %v378
        %v385 = vpop.permute.xlu0 %384
        %388 = vset.pattern.permute.xlu0 0
        %389 = vperm.xlu0 %388, %v379
        %v390 = vpop.permute.xlu0 %389
        %393 = vset.pattern.permute.xlu0 0
        %394 = vperm.xlu0 %393, %v380
        %v395 = vpop.permute.xlu0 %394
        %398 = vset.pattern.permute.xlu0 0
        %399 = vperm.xlu0 %398, %v381
        %v400 = vpop.permute.xlu0 %399
        %v404 = vcombine.high %v372, %v372
        %v405 = vcombine.high %v373, %v373
        %vm406 = vcmask 31744
        %v408 = vsel %vm406, %v374, 0
        %v411 = vsel %vm406, %v375, 0
        %v414 = vsel %vm406, %v376, 0
        %v417 = vsel %vm406, %v377, 0
        %vm419 = vcmask 1043456
        %v420 = vsel %vm419, %v372, 0
        %v422 = vsel %vm419, %v404, 0
        %v424 = vsel %vm419, %v373, 0
        %v426 = vsel %vm419, %v405, 0
        %428 = vmatprep.subr.mxu0 %v422
        %429 = vmatpush1.msra.mxu0 %v420
        %430 = vmatprep.subr.mxu0 0.0
        %431 = vmatpush1.msra.mxu0 0.0
        %432 = vmatprep.subr.mxu0 0.0
        %433 = vmatpush1.msra.mxu0 0.0
        %434 = vmatprep.subr.mxu0 0.0
        %435 = vmatpush1.msra.mxu0 0.0
        %436 = vmatprep.subr.mxu0 0.0
        %437 = vmatpush1.msra.mxu0 0.0
        %438 = vmatprep.subr.mxu0 0.0
        %439 = vmatpush1.msra.mxu0 0.0
        %440 = vmatprep.subr.mxu0 0.0
        %441 = vmatpush1.msra.mxu0 0.0
        %442 = vmatprep.subr.mxu0 0.0
        %443 = vmatpush1.msra.mxu0 0.0
        %444 = vmatprep.subr.mxu0 0.0
        %445 = vmatpush1.msra.mxu0 0.0
        %446 = vmatprep.subr.mxu0 0.0
        %447 = vmatpush1.msra.mxu0 0.0
        %448 = vmatprep.subr.mxu0 0.0
        %449 = vmatpush1.msra.mxu0 0.0
        %450 = vmatprep.subr.mxu0 0.0
        %451 = vmatpush1.msra.mxu0 0.0
        %452 = vmatprep.subr.mxu0 0.0
        %453 = vmatpush1.msra.mxu0 0.0
        %454 = vmatprep.subr.mxu0 0.0
        %455 = vmatpush1.msra.mxu0 0.0
        %456 = vmatprep.subr.mxu0 0.0
        %457 = vmatpush1.msra.mxu0 0.0
        %458 = vmatprep.subr.mxu0 0.0
        %459 = vmatpush1.msra.mxu0 0.0
        %460 = vmatprep.subr.mxu0 0.0
        %461 = vmatpush1.msra.mxu0 0.0
        %462 = vmatprep.subr.mxu0 0.0
        %463 = vmatpush1.msra.mxu0 0.0
        %464 = vmatprep.subr.mxu0 0.0
        %465 = vmatpush1.msra.mxu0 0.0
        %466 = vmatprep.subr.mxu0 0.0
        %467 = vmatpush1.msra.mxu0 0.0
        %468 = vmatprep.subr.mxu0 0.0
        %469 = vmatpush1.msra.mxu0 0.0
        %470 = vmatprep.subr.mxu0 0.0
        %471 = vmatpush1.msra.mxu0 0.0
        %472 = vmatprep.subr.mxu0 0.0
        %473 = vmatpush1.msra.mxu0 0.0
        %474 = vmatprep.subr.mxu0 0.0
        %475 = vmatpush1.msra.mxu0 0.0
        %476 = vmatprep.subr.mxu0 0.0
        %477 = vmatpush1.msra.mxu0 0.0
        %478 = vmatprep.subr.mxu0 0.0
        %479 = vmatpush1.msra.mxu0 0.0
        %480 = vmatprep.subr.mxu0 0.0
        %481 = vmatpush1.msra.mxu0 0.0
        %482 = vmatprep.subr.mxu0 0.0
        %483 = vmatpush1.msra.mxu0 0.0
        %484 = vmatprep.subr.mxu0 0.0
        %485 = vmatpush1.msra.mxu0 0.0
        %486 = vmatprep.subr.mxu0 0.0
        %487 = vmatpush1.msra.mxu0 0.0
        %488 = vmatprep.subr.mxu0 0.0
        %489 = vmatpush1.msra.mxu0 0.0
        %490 = vmatprep.subr.mxu0 0.0
        %491 = vmatpush1.msra.mxu0 0.0
        %492 = vmatprep.mubr.f32.mxu0 0.0
        %493 = vmatmul.mubr.f32.gmra.mrb[0].mxu0 %v408
        %v494 = vpop.f32.mrb[0].mxu0
        %v495 = vadd.f32 %v385, %v494
        %v496 = vpop.f32.mrb[0].mxu0
        %v497 = vadd.f32 %v385, %v496
        %498 = vmatprep.mubr.f32.mxu0 0.0
        %499 = vmatmul.mubr.f32.gmra.mrb[0].mxu0 %v411
        %v500 = vpop.f32.mrb[0].mxu0
        %v501 = vadd.f32 %v390, %v500
        %v502 = vpop.f32.mrb[0].mxu0
        %v503 = vadd.f32 %v390, %v502
        %504 = vmatprep.mubr.f32.mxu0 0.0
        %505 = vmatmul.mubr.f32.gmra.mrb[0].mxu0 %v414
        %v506 = vpop.f32.mrb[0].mxu0
        %v507 = vadd.f32 %v395, %v506
        %v508 = vpop.f32.mrb[0].mxu0
        %v509 = vadd.f32 %v395, %v508
        %510 = vmatprep.mubr.f32.mxu0 0.0
        %511 = vmatmul.mubr.f32.gmra.mrb[0].mxu0 %v417
        %v512 = vpop.f32.mrb[0].mxu0
        %v513 = vadd.f32 %v400, %v512
        %v514 = vpop.f32.mrb[0].mxu0
        %v515 = vadd.f32 %v400, %v514
        %516 = vdwg.mxu0
        %517 = vmatprep.subr.mxu0 %v426
        %518 = vmatpush1.msra.mxu0 %v424
        %519 = vmatprep.subr.mxu0 0.0
        %520 = vmatpush1.msra.mxu0 0.0
        %521 = vmatprep.subr.mxu0 0.0
        %522 = vmatpush1.msra.mxu0 0.0
        %523 = vmatprep.subr.mxu0 0.0
        %524 = vmatpush1.msra.mxu0 0.0
        %525 = vmatprep.subr.mxu0 0.0
        %526 = vmatpush1.msra.mxu0 0.0
        %527 = vmatprep.subr.mxu0 0.0
        %528 = vmatpush1.msra.mxu0 0.0
        %529 = vmatprep.subr.mxu0 0.0
        %530 = vmatpush1.msra.mxu0 0.0
        %531 = vmatprep.subr.mxu0 0.0
        %532 = vmatpush1.msra.mxu0 0.0
        %533 = vmatprep.subr.mxu0 0.0
        %534 = vmatpush1.msra.mxu0 0.0
        %535 = vmatprep.subr.mxu0 0.0
        %536 = vmatpush1.msra.mxu0 0.0
        %537 = vmatprep.subr.mxu0 0.0
        %538 = vmatpush1.msra.mxu0 0.0
        %539 = vmatprep.subr.mxu0 0.0
        %540 = vmatpush1.msra.mxu0 0.0
        %541 = vmatprep.subr.mxu0 0.0
        %542 = vmatpush1.msra.mxu0 0.0
        %543 = vmatprep.subr.mxu0 0.0
        %544 = vmatpush1.msra.mxu0 0.0
        %545 = vmatprep.subr.mxu0 0.0
        %546 = vmatpush1.msra.mxu0 0.0
        %547 = vmatprep.subr.mxu0 0.0
        %548 = vmatpush1.msra.mxu0 0.0
        %549 = vmatprep.subr.mxu0 0.0
        %550 = vmatpush1.msra.mxu0 0.0
        %551 = vmatprep.subr.mxu0 0.0
        %552 = vmatpush1.msra.mxu0 0.0
        %553 = vmatprep.subr.mxu0 0.0
        %554 = vmatpush1.msra.mxu0 0.0
        %555 = vmatprep.subr.mxu0 0.0
        %556 = vmatpush1.msra.mxu0 0.0
        %557 = vmatprep.subr.mxu0 0.0
        %558 = vmatpush1.msra.mxu0 0.0
        %559 = vmatprep.subr.mxu0 0.0
        %560 = vmatpush1.msra.mxu0 0.0
        %561 = vmatprep.subr.mxu0 0.0
        %562 = vmatpush1.msra.mxu0 0.0
        %563 = vmatprep.subr.mxu0 0.0
        %564 = vmatpush1.msra.mxu0 0.0
        %565 = vmatprep.subr.mxu0 0.0
        %566 = vmatpush1.msra.mxu0 0.0
        %567 = vmatprep.subr.mxu0 0.0
        %568 = vmatpush1.msra.mxu0 0.0
        %569 = vmatprep.subr.mxu0 0.0
        %570 = vmatpush1.msra.mxu0 0.0
        %571 = vmatprep.subr.mxu0 0.0
        %572 = vmatpush1.msra.mxu0 0.0
        %573 = vmatprep.subr.mxu0 0.0
        %574 = vmatpush1.msra.mxu0 0.0
        %575 = vmatprep.subr.mxu0 0.0
        %576 = vmatpush1.msra.mxu0 0.0
        %577 = vmatprep.subr.mxu0 0.0
        %578 = vmatpush1.msra.mxu0 0.0
        %579 = vmatprep.subr.mxu0 0.0
        %580 = vmatpush1.msra.mxu0 0.0
        %581 = vmatprep.mubr.f32.mxu0 0.0
        %582 = vmatmul.mubr.f32.gmra.mrb[0].mxu0 %v408
        %v583 = vpop.f32.mrb[0].mxu0
        %v584 = vadd.f32 %v385, %v583
        %v585 = vpop.f32.mrb[0].mxu0
        %v586 = vadd.f32 %v385, %v585
        %587 = vmatprep.mubr.f32.mxu0 0.0
        %588 = vmatmul.mubr.f32.gmra.mrb[0].mxu0 %v411
        %v589 = vpop.f32.mrb[0].mxu0
        %v590 = vadd.f32 %v390, %v589
        %v591 = vpop.f32.mrb[0].mxu0
        %v592 = vadd.f32 %v390, %v591
        %593 = vmatprep.mubr.f32.mxu0 0.0
        %594 = vmatmul.mubr.f32.gmra.mrb[0].mxu0 %v414
        %v595 = vpop.f32.mrb[0].mxu0
        %v596 = vadd.f32 %v395, %v595
        %v597 = vpop.f32.mrb[0].mxu0
        %v598 = vadd.f32 %v395, %v597
        %599 = vmatprep.mubr.f32.mxu0 0.0
        %600 = vmatmul.mubr.f32.gmra.mrb[0].mxu0 %v417
        %v601 = vpop.f32.mrb[0].mxu0
        %v602 = vadd.f32 %v400, %v601
        %v603 = vpop.f32.mrb[0].mxu0
        %v604 = vadd.f32 %v400, %v603
        %605 = vdwg.mxu0
        %v606 = vxor.u32 %v495, 2147483648
        %v607 = vxor.u32 %v497, 2147483648
        %v608 = vxor.u32 %v584, 2147483648
        %v609 = vxor.u32 %v586, 2147483648
        %v610 = vxor.u32 %v501, 2147483648
        %v611 = vxor.u32 %v503, 2147483648
        %v612 = vxor.u32 %v590, 2147483648
        %v613 = vxor.u32 %v592, 2147483648
        %v614 = vxor.u32 %v507, 2147483648
        %v615 = vxor.u32 %v509, 2147483648
        %v616 = vxor.u32 %v596, 2147483648
        %v617 = vxor.u32 %v598, 2147483648
        %v618 = vxor.u32 %v513, 2147483648
        %v619 = vxor.u32 %v515, 2147483648
        %v620 = vxor.u32 %v602, 2147483648
        %v621 = vxor.u32 %v604, 2147483648
        %v622 = vmul.f32 %v606, 1.442695
        %v623 = vpow.pop %v622
        %v624 = vmul.f32 %v607, 1.442695
        %v625 = vpow.pop %v624
        %v626 = vmul.f32 %v608, 1.442695
        %v627 = vpow.pop %v626
        %v628 = vmul.f32 %v609, 1.442695
        %v629 = vpow.pop %v628
        %v630 = vmul.f32 %v610, 1.442695
        %v631 = vpow.pop %v630
        %v632 = vmul.f32 %v611, 1.442695
        %v633 = vpow.pop %v632
        %v634 = vmul.f32 %v612, 1.442695
        %v635 = vpow.pop %v634
        %v636 = vmul.f32 %v613, 1.442695
        %v637 = vpow.pop %v636
        %v638 = vmul.f32 %v614, 1.442695
        %v639 = vpow.pop %v638
        %v640 = vmul.f32 %v615, 1.442695
        %v641 = vpow.pop %v640
        %v642 = vmul.f32 %v616, 1.442695
        %v643 = vpow.pop %v642
        %v644 = vmul.f32 %v617, 1.442695
        %v645 = vpow.pop %v644
        %v646 = vmul.f32 %v618, 1.442695
        %v647 = vpow.pop %v646
        %v648 = vmul.f32 %v619, 1.442695
        %v649 = vpow.pop %v648
        %v650 = vmul.f32 %v620, 1.442695
        %v651 = vpow.pop %v650
        %v652 = vmul.f32 %v621, 1.442695
        %v653 = vpow.pop %v652
        %v654 = vadd.f32 %v623, 1.0
        %v655 = vadd.f32 %v625, 1.0
        %v656 = vadd.f32 %v627, 1.0
        %v657 = vadd.f32 %v629, 1.0
        %v658 = vadd.f32 %v631, 1.0
        %v659 = vadd.f32 %v633, 1.0
        %v660 = vadd.f32 %v635, 1.0
        %v661 = vadd.f32 %v637, 1.0
        %v662 = vadd.f32 %v639, 1.0
        %v663 = vadd.f32 %v641, 1.0
        %v664 = vadd.f32 %v643, 1.0
        %v665 = vadd.f32 %v645, 1.0
        %v666 = vadd.f32 %v647, 1.0
        %v667 = vadd.f32 %v649, 1.0
        %v668 = vadd.f32 %v651, 1.0
        %v669 = vadd.f32 %v653, 1.0
        %v670 = vrcp.pop %v654
        %v671 = vmul.f32 1.0, %v670
        %v672 = vrcp.pop %v655
        %v673 = vmul.f32 1.0, %v672
        %v674 = vrcp.pop %v656
        %v675 = vmul.f32 1.0, %v674
        %v676 = vrcp.pop %v657
        %v677 = vmul.f32 1.0, %v676
        %v678 = vrcp.pop %v658
        %v679 = vmul.f32 1.0, %v678
        %v680 = vrcp.pop %v659
        %v681 = vmul.f32 1.0, %v680
        %v682 = vrcp.pop %v660
        %v683 = vmul.f32 1.0, %v682
        %v684 = vrcp.pop %v661
        %v685 = vmul.f32 1.0, %v684
        %v686 = vrcp.pop %v662
        %v687 = vmul.f32 1.0, %v686
        %v688 = vrcp.pop %v663
        %v689 = vmul.f32 1.0, %v688
        %v690 = vrcp.pop %v664
        %v691 = vmul.f32 1.0, %v690
        %v692 = vrcp.pop %v665
        %v693 = vmul.f32 1.0, %v692
        %v694 = vrcp.pop %v666
        %v695 = vmul.f32 1.0, %v694
        %v696 = vrcp.pop %v667
        %v697 = vmul.f32 1.0, %v696
        %v698 = vrcp.pop %v668
        %v699 = vmul.f32 1.0, %v698
        %v700 = vrcp.pop %v669
        %v701 = vmul.f32 1.0, %v700
        %v702 = vmul.f32 %v495, %v671
        %v703 = vmul.f32 %v497, %v673
        %v704 = vmul.f32 %v584, %v675
        %v705 = vmul.f32 %v586, %v677
        %v706 = vmul.f32 %v501, %v679
        %v707 = vmul.f32 %v503, %v681
        %v708 = vmul.f32 %v590, %v683
        %v709 = vmul.f32 %v592, %v685
        %v710 = vmul.f32 %v507, %v687
        %v711 = vmul.f32 %v509, %v689
        %v712 = vmul.f32 %v596, %v691
        %v713 = vmul.f32 %v598, %v693
        %v714 = vmul.f32 %v513, %v695
        %v715 = vmul.f32 %v515, %v697
        %v716 = vmul.f32 %v602, %v699
        %v717 = vmul.f32 %v604, %v701
        %v718 = vld [vmem:[%s5] sm:$0xf]
        %v719 = vld [vmem:[%s6] sm:$0xf]
        %721 = vset.pattern.permute.xlu0 0
        %722 = vperm.xlu0 %721, %v719
        %v723 = vpop.permute.xlu0 %722
        %vm725 = vcmask 261120
        %v727 = vsel %vm725, %v718, 0
        %729 = vmatprep.subr.mxu0 %v703
        %730 = vmatpush1.msra.mxu0 %v702
        %731 = vmatprep.subr.mxu0 %v707
        %732 = vmatpush1.msra.mxu0 %v706
        %733 = vmatprep.subr.mxu0 %v711
        %734 = vmatpush1.msra.mxu0 %v710
        %735 = vmatprep.subr.mxu0 %v715
        %736 = vmatpush1.msra.mxu0 %v714
        %737 = vmatprep.subr.mxu0 0.0
        %738 = vmatpush1.msra.mxu0 0.0
        %739 = vmatprep.subr.mxu0 0.0
        %740 = vmatpush1.msra.mxu0 0.0
        %741 = vmatprep.subr.mxu0 0.0
        %742 = vmatpush1.msra.mxu0 0.0
        %743 = vmatprep.subr.mxu0 0.0
        %744 = vmatpush1.msra.mxu0 0.0
        %745 = vmatprep.subr.mxu0 0.0
        %746 = vmatpush1.msra.mxu0 0.0
        %747 = vmatprep.subr.mxu0 0.0
        %748 = vmatpush1.msra.mxu0 0.0
        %749 = vmatprep.subr.mxu0 0.0
        %750 = vmatpush1.msra.mxu0 0.0
        %751 = vmatprep.subr.mxu0 0.0
        %752 = vmatpush1.msra.mxu0 0.0
        %753 = vmatprep.subr.mxu0 0.0
        %754 = vmatpush1.msra.mxu0 0.0
        %755 = vmatprep.subr.mxu0 0.0
        %756 = vmatpush1.msra.mxu0 0.0
        %757 = vmatprep.subr.mxu0 0.0
        %758 = vmatpush1.msra.mxu0 0.0
        %759 = vmatprep.subr.mxu0 0.0
        %760 = vmatpush1.msra.mxu0 0.0
        %761 = vmatprep.subr.mxu0 0.0
        %762 = vmatpush1.msra.mxu0 0.0
        %763 = vmatprep.subr.mxu0 0.0
        %764 = vmatpush1.msra.mxu0 0.0
        %765 = vmatprep.subr.mxu0 0.0
        %766 = vmatpush1.msra.mxu0 0.0
        %767 = vmatprep.subr.mxu0 0.0
        %768 = vmatpush1.msra.mxu0 0.0
        %769 = vmatprep.subr.mxu0 0.0
        %770 = vmatpush1.msra.mxu0 0.0
        %771 = vmatprep.subr.mxu0 0.0
        %772 = vmatpush1.msra.mxu0 0.0
        %773 = vmatprep.subr.mxu0 0.0
        %774 = vmatpush1.msra.mxu0 0.0
        %775 = vmatprep.subr.mxu0 0.0
        %776 = vmatpush1.msra.mxu0 0.0
        %777 = vmatprep.subr.mxu0 0.0
        %778 = vmatpush1.msra.mxu0 0.0
        %779 = vmatprep.subr.mxu0 0.0
        %780 = vmatpush1.msra.mxu0 0.0
        %781 = vmatprep.subr.mxu0 0.0
        %782 = vmatpush1.msra.mxu0 0.0
        %783 = vmatprep.subr.mxu0 0.0
        %784 = vmatpush1.msra.mxu0 0.0
        %785 = vmatprep.subr.mxu0 0.0
        %786 = vmatpush1.msra.mxu0 0.0
        %787 = vmatprep.subr.mxu0 0.0
        %788 = vmatpush1.msra.mxu0 0.0
        %789 = vmatprep.subr.mxu0 0.0
        %790 = vmatpush1.msra.mxu0 0.0
        %791 = vmatprep.subr.mxu0 0.0
        %792 = vmatpush1.msra.mxu0 0.0
        %793 = vmatprep.mubr.f32.mxu0 0.0
        %794 = vmatmul.mubr.f32.gmra.mrb[0].mxu0 %v727
        %v795 = vpop.f32.mrb[0].mxu0
        %v796 = vadd.f32 %v723, %v795
        %v797 = vpop.f32.mrb[0].mxu0
        %v798 = vadd.f32 %v723, %v797
        %799 = vdwg.mxu0
        %800 = vmatprep.subr.mxu0 %v705
        %801 = vmatpush1.msra.mxu0 %v704
        %802 = vmatprep.subr.mxu0 %v709
        %803 = vmatpush1.msra.mxu0 %v708
        %804 = vmatprep.subr.mxu0 %v713
        %805 = vmatpush1.msra.mxu0 %v712
        %806 = vmatprep.subr.mxu0 %v717
        %807 = vmatpush1.msra.mxu0 %v716
        %808 = vmatprep.subr.mxu0 0.0
        %809 = vmatpush1.msra.mxu0 0.0
        %810 = vmatprep.subr.mxu0 0.0
        %811 = vmatpush1.msra.mxu0 0.0
        %812 = vmatprep.subr.mxu0 0.0
        %813 = vmatpush1.msra.mxu0 0.0
        %814 = vmatprep.subr.mxu0 0.0
        %815 = vmatpush1.msra.mxu0 0.0
        %816 = vmatprep.subr.mxu0 0.0
        %817 = vmatpush1.msra.mxu0 0.0
        %818 = vmatprep.subr.mxu0 0.0
        %819 = vmatpush1.msra.mxu0 0.0
        %820 = vmatprep.subr.mxu0 0.0
        %821 = vmatpush1.msra.mxu0 0.0
        %822 = vmatprep.subr.mxu0 0.0
        %823 = vmatpush1.msra.mxu0 0.0
        %824 = vmatprep.subr.mxu0 0.0
        %825 = vmatpush1.msra.mxu0 0.0
        %826 = vmatprep.subr.mxu0 0.0
        %827 = vmatpush1.msra.mxu0 0.0
        %828 = vmatprep.subr.mxu0 0.0
        %829 = vmatpush1.msra.mxu0 0.0
        %830 = vmatprep.subr.mxu0 0.0
        %831 = vmatpush1.msra.mxu0 0.0
        %832 = vmatprep.subr.mxu0 0.0
        %833 = vmatpush1.msra.mxu0 0.0
        %834 = vmatprep.subr.mxu0 0.0
        %835 = vmatpush1.msra.mxu0 0.0
        %836 = vmatprep.subr.mxu0 0.0
        %837 = vmatpush1.msra.mxu0 0.0
        %838 = vmatprep.subr.mxu0 0.0
        %839 = vmatpush1.msra.mxu0 0.0
        %840 = vmatprep.subr.mxu0 0.0
        %841 = vmatpush1.msra.mxu0 0.0
        %842 = vmatprep.subr.mxu0 0.0
        %843 = vmatpush1.msra.mxu0 0.0
        %844 = vmatprep.subr.mxu0 0.0
        %845 = vmatpush1.msra.mxu0 0.0
        %846 = vmatprep.subr.mxu0 0.0
        %847 = vmatpush1.msra.mxu0 0.0
        %848 = vmatprep.subr.mxu0 0.0
        %849 = vmatpush1.msra.mxu0 0.0
        %850 = vmatprep.subr.mxu0 0.0
        %851 = vmatpush1.msra.mxu0 0.0
        %852 = vmatprep.subr.mxu0 0.0
        %853 = vmatpush1.msra.mxu0 0.0
        %854 = vmatprep.subr.mxu0 0.0
        %855 = vmatpush1.msra.mxu0 0.0
        %856 = vmatprep.subr.mxu0 0.0
        %857 = vmatpush1.msra.mxu0 0.0
        %858 = vmatprep.subr.mxu0 0.0
        %859 = vmatpush1.msra.mxu0 0.0
        %860 = vmatprep.subr.mxu0 0.0
        %861 = vmatpush1.msra.mxu0 0.0
        %862 = vmatprep.subr.mxu0 0.0
        %863 = vmatpush1.msra.mxu0 0.0
        %864 = vmatprep.mubr.f32.mxu0 0.0
        %865 = vmatmul.mubr.f32.gmra.mrb[0].mxu0 %v727
        %v866 = vpop.f32.mrb[0].mxu0
        %v867 = vadd.f32 %v723, %v866
        %v868 = vpop.f32.mrb[0].mxu0
        %v869 = vadd.f32 %v723, %v868
        %870 = vdwg.mxu0
        %s871 = smul.u32 %s24, 128
        %s872 = sld [smem:[#allocation3 + %s871]]
        %s873 = sadd.s32 %s871, 1
        %s874 = sld [smem:[#allocation3 + %s873]]
        %s875 = sadd.s32 %s871, 2
        %s876 = sld [smem:[#allocation3 + %s875]]
        %v877 = vstv %s872
        %v878 = vmul.f32 %v877, %v372
        %v879 = vmul.f32 %v877, %v373
        %v880 = vstv %s874
        %v881 = vmul.f32 %v880, %v796
        %v882 = vmul.f32 %v880, %v798
        %v883 = vmul.f32 %v880, %v867
        %v884 = vmul.f32 %v880, %v869
        %v889 = vcombine.low %v881, %v882
        %v890 = vcombine.low %v883, %v884
        %v893 = vsub.f32 %v878, %v889
        %v894 = vsub.f32 %v879, %v890
        %895 = vst [vmem:[#allocation2] sm:$0xff] %v893
        %896 = vst [vmem:[#allocation2 + $0x8] sm:$0xff] %v894
        %p897 = scmp.gt.f32.partialorder %s876, 0.0
        // Predicated region
        $region57: #{_sample_jit.1} parent=47 // pred_check
          %p898 = pneg %p897
        $region58: #{_sample_jit.1} parent=47 // pred_check_branch
          %900 = sbr.rel (%p898) target = $region60
        $region59: #{_sample_jit.1} parent=47 // pred_region
          %v901 = vld [vmem:[#allocation2] sm:$0xff]
          %v902 = vld [vmem:[#allocation2 + $0x8] sm:$0xff]
          %v903 = vld [vmem:[%s351] sm:$0xff]
          %v904 = vunpack.c.l.bf16 %v903
          %v905 = vunpack.c.h.bf16 %v903
          %v906 = vstv %s876
          %v907 = vmul.f32 %v906, %v904
          %v908 = vmul.f32 %v906, %v905
          %v909 = vadd.f32 %v901, %v907
          %v910 = vadd.f32 %v902, %v908
          %911 = vst [vmem:[#allocation2] sm:$0xff] %v909
          %912 = vst [vmem:[#allocation2 + $0x8] sm:$0xff] %v910
        $region60: #{_sample_jit.1} parent=47 // pred_fallthru
          _
        %p913 = scmp.eq.s32.totalorder %s24, 7
        // Predicated region
        $region61: #{_sample_jit.1} parent=47 // pred_check
          %p914 = pneg %p913
        $region62: #{_sample_jit.1} parent=47 // pred_check_branch
          %916 = sbr.rel (%p914) target = $region64
        $region63: #{_sample_jit.1} parent=47 // pred_region
          %v917 = vld [vmem:[#allocation2] sm:$0xff]
          %v918 = vld [vmem:[#allocation2 + $0x8] sm:$0xff]
          %v919 = vmax.f32 %v917, -1.0
          %v920 = vmax.f32 %v918, -1.0
          %v921 = vmin.f32 %v919, 1.0
          %v922 = vmin.f32 %v920, 1.0
          %923 = vst [vmem:[%s362] sm:$0xff] %v921
          %924 = vst [vmem:[%s362 + $0x8] sm:$0xff] %v922
        $region64: #{_sample_jit.1} parent=47 // pred_fallthru
          _
        %s925 = smul.u32 4, %s23
        %p926 = scmp.lt.s32.totalorder %s925, 3
        %s927 = scalar_select %p926, %s925, 3
        %s928 = smul.addr %s927, 4
        %s929 = scalar_lea.vmem %s7, %s928
        // Predicated region
        $region65: #{_sample_jit.1} parent=47 // pred_check
          %p930 = pneg %p213
        $region66: #{_sample_jit.1} parent=47 // pred_check_branch
          %932 = sbr.rel (%p930) target = $region68
        $region67: #{_sample_jit.1} parent=47 // pred_region
          %s933 = smul.u32 4, %s23
        $region68: #{_sample_jit.1} parent=47 // pred_fallthru
          _
        // Predicated region
        $region69: #{_sample_jit.1} parent=47 // pred_check
          %p934 = pneg %p213
        $region70: #{_sample_jit.1} parent=47 // pred_check_branch
          %936 = sbr.rel (%p934) target = $region72
        $region71: #{_sample_jit.1} parent=47 // pred_region
          %s937 = smul.u32 4, %s23
          %p938 = scmp.lt.s32.totalorder %s937, 3
          %s939 = scalar_select %p938, %s937, 3
          %s940 = smul.addr %s939, 4
          %s941 = scalar_lea.vmem %s7, %s940
        $region72: #{_sample_jit.1} parent=47 // pred_fallthru
          _
      $region48: #{_sample_jit.1} parent=5 // pred_fallthru
        _
      %p942 = scmp.le.s32.totalorder 2, %s14
      // Predicated region
      $region73: #{_sample_jit.1} parent=5 // pred_check
        %p943 = pneg %p942
      $region74: #{_sample_jit.1} parent=5 // pred_check_branch
        %945 = sbr.rel (%p943) target = $region76
      $region75: #{_sample_jit.1} parent=5 // pred_region
        %s946 = ssub.s32 %s14, 2
      $region76: #{_sample_jit.1} parent=5 // pred_fallthru
        _
    $region6: #{_sample_jit.1} parent=1 // loop_footer
      %s18 = sadd.s32 1, %s14
    $region7: #{_sample_jit.1} parent=1 // loop_footer_branch
      %13 = sbr.rel target = $region3
    $region8: #{_sample_jit.1} parent=1 // loop_exit
      _
    %947 = vsyncpa [#allocation4], 1
    %s948 = scalar_lea.sflag [#allocation4], 1
    %949 = vsyncpa %s948, 1

</llo_original>
